<compile_context>
chip_gen: v7x
topology: tpu7x:2x2x1
jax: 0.10.0
libtpu: 0.0.40
codegen_flags: <defaults>
</compile_context>

<pallas_src>
import functools

import jax
import jax.numpy as jnp
from jax.experimental import pallas as pl
from jax.experimental.pallas import tpu as pltpu

# ---- concrete model configuration ------------------------------------------
C_IN, C_OUT, KH, KW = 4, 8, 3, 3
LANE = 128


def _round_up(x, m):
    return (x + m - 1) // m * m


def _pick_image_batch(N, H):
    """Images per grid step: aim for ~256 rows per MXU pass, keep >= 2 steps."""
    b = max(1, 256 // max(H, 1))
    if N >= 2:
        # keep at least 2 grid steps so v7x's two TensorCores both get work
        b = min(b, max(1, N // 2))
    return max(1, min(b, N))


def mp_conv_relu_kernel(x_ref, w_ref, b_ref, o_ref, *, B, H):
    # x_ref: (B, H+2, Kp)       bf16  zero-padded NHWC-flattened images (lane-padded)
    # w_ref: (KH*Kp, W*C_OUT)   bf16  ky/kx-folded conv weights (grid-resident)
    # b_ref: (1, W*C_OUT)       f32   bias tiled across W
    # o_ref: (B, H, W*C_OUT)    bf16  lane-dense NHWC-flattened output
    #
    # Fused LHS: concatenate the KH row-shifted slabs along the lane axis so
    # the conv is ONE MXU matmul.  Kp is a multiple of 128, so the concat
    # offsets are vreg-aligned.  Row-offset slices + concat are done in f32
    # (avoids packed-bf16 sublane-offset relayouts); the single down-cast to
    # bf16 is exact, so autocast numerics (bf16 operands, fp32 acc) hold.
    xt = x_ref[...].astype(jnp.float32)                         # (B, H+2, Kp)
    lhs = jnp.concatenate([xt[:, ky:ky + H, :] for ky in range(KH)], axis=-1)
    lhs = lhs.reshape(B * H, lhs.shape[-1]).astype(jnp.bfloat16)  # (B*H, KH*Kp)
    acc = jnp.dot(lhs, w_ref[...], preferred_element_type=jnp.float32)
    acc = jnp.maximum(acc + b_ref[...], 0.0)                    # bias + ReLU in fp32
    for b in range(B):                                          # static unroll
        o_ref[b] = acc[b * H:(b + 1) * H, :].astype(o_ref.dtype)


def prepare_mixed_precision_params(weight, bias, W):
    """Fold the conv weights into a single (KH*Kp, W*C_OUT) matmul operand.

    W_fused[ky*Kp + w2*C_IN + c, v*C_OUT + f] = weight[f, c, ky, w2 - v]
    (zero when w2 - v is outside [0, KW) or the row is lane padding).
    Hoisted out of the forward: call once per weight update.
    """
    Kp = _round_up((W + 2) * C_IN, LANE)
    v_plus_kx = jnp.arange(W)[:, None] + jnp.arange(KW)[None, :]       # (W, KW)
    shift = jax.nn.one_hot(v_plus_kx, W + 2, dtype=jnp.float32)        # (W, KW, W+2)
    w_kcf = jnp.transpose(weight, (2, 3, 1, 0)).astype(jnp.float32)    # (KH,KW,C,F)
    w_big = jnp.einsum('vkw,ykcf->ywcvf', shift, w_kcf)                # (KH,W+2,C,W,F)
    w_big = w_big.reshape(KH, (W + 2) * C_IN, W * C_OUT)
    w_big = jnp.pad(w_big, ((0, 0), (0, Kp - (W + 2) * C_IN), (0, 0)))
    w_fused = w_big.reshape(KH * Kp, W * C_OUT).astype(jnp.bfloat16)
    b_row = jnp.tile(bias.astype(jnp.float32), W).reshape(1, W * C_OUT)
    return w_fused, b_row


@jax.jit
def mixed_precision_forward(x_nchw, w_fused, b_row):
    """Forward of mixedPrecision(Conv2d(4,8,3,pad=1) + ReLU) under autocast.

    x_nchw: (N, C_IN, H, W) f32.  Returns (N, C_OUT, H, W) bf16.
    """
    N, C, H, W = x_nchw.shape
    assert C == C_IN
    Kp = w_fused.shape[0] // KH
    F = w_fused.shape[1]          # = W * C_OUT (128 for W=16 -> full-width stores)

    B = _pick_image_batch(N, H)
    Np = _round_up(N, B)

    # One fused XLA pass over the input: NCHW->NHWC, SAME pad, flatten (W+2,C)
    # into the lane axis, lane-pad to Kp, cast to bf16 (halves kernel HBM in),
    # and pad the batch up to a multiple of B.
    x_nhwc = jnp.transpose(x_nchw, (0, 2, 3, 1))                       # (N,H,W,C)
    xp = jnp.pad(x_nhwc, ((0, Np - N), (1, 1), (1, 1), (0, 0)))        # (Np,H+2,W+2,C)
    x2d = xp.reshape(Np, H + 2, (W + 2) * C_IN)
    x2d = jnp.pad(x2d, ((0, 0), (0, 0), (0, Kp - (W + 2) * C_IN)))
    x2d = x2d.astype(jnp.bfloat16)                                     # (Np,H+2,Kp)

    kernel = functools.partial(mp_conv_relu_kernel, B=B, H=H)

    out3 = pl.pallas_call(
        kernel,
        out_shape=jax.ShapeDtypeStruct((Np, H, F), jnp.bfloat16),
        grid_spec=pltpu.PrefetchScalarGridSpec(
            num_scalar_prefetch=0,
            grid=(Np // B,),
            in_specs=[
                pl.BlockSpec((B, H + 2, Kp), lambda n: (n, 0, 0)),
                pl.BlockSpec((KH * Kp, F), lambda n: (0, 0)),
                pl.BlockSpec((1, F), lambda n: (0, 0)),
            ],
            out_specs=pl.BlockSpec((B, H, F), lambda n: (n, 0, 0)),
        ),
        compiler_params=pltpu.CompilerParams(
            dimension_semantics=("parallel",),
        ),
    )(x2d, w_fused, b_row)

    # TODO(synk): keep NHWC end-to-end when the surrounding graph allows; this
    # final transpose is the only remaining extra HBM pass on the output.
    out = out3[:N].reshape(N, H, W, C_OUT).transpose(0, 3, 1, 2)
    return out


def reference_forward(x_nchw, weight, bias):
    """Pure-JAX reference with the same autocast semantics."""
    xb = x_nchw.astype(jnp.bfloat16)
    wb = weight.astype(jnp.bfloat16)
    y = jax.lax.conv_general_dilated(
        xb, wb, window_strides=(1, 1), padding="SAME",
        dimension_numbers=("NCHW", "OIHW", "NCHW"),
        preferred_element_type=jnp.float32,
    ) + bias.reshape(1, C_OUT, 1, 1).astype(jnp.float32)
    y = jnp.maximum(y, 0.0)
    return y.astype(jnp.bfloat16)


if __name__ == "__main__":
    key = jax.random.PRNGKey(0)
    kx, kw, kb = jax.random.split(key, 3)

    N, H, W = 2, 16, 16
    x = jax.random.normal(kx, (N, C_IN, H, W), dtype=jnp.float32)
    weight = 0.1 * jax.random.normal(kw, (C_OUT, C_IN, KH, KW), dtype=jnp.float32)
    bias = 0.05 * jax.random.normal(kb, (C_OUT,), dtype=jnp.float32)

    # Fold/pack the conv params once (hoisted out of the per-forward hot path).
    w_fused, b_row = prepare_mixed_precision_params(weight, bias, W)

    out = jax.block_until_ready(mixed_precision_forward(x, w_fused, b_row))
    ref = jax.block_until_ready(reference_forward(x, weight, bias))

    assert out.shape == (N, C_OUT, H, W)
    assert out.dtype == jnp.bfloat16
    err = jnp.max(jnp.abs(out.astype(jnp.float32) - ref.astype(jnp.float32)))
    # Both sides use bf16 operands with fp32 accumulation; allow ~1 bf16 ulp of
    # summation-order slop on O(1) activations.
    assert err < 2e-2, f"max abs error {err}"

    print("KERNEL_OK")
</pallas_src>

<mosaic_0001>
module attributes {stable_mosaic.version = 11 : i64} {
  func.func @mp_conv_relu_kernel(%arg0: i32, %arg1: memref<1x18x128xbf16, #tpu.memory_space<vmem>>, %arg2: memref<384x128xbf16, #tpu.memory_space<vmem>>, %arg3: memref<1x128xf32, #tpu.memory_space<vmem>>, %arg4: memref<1x16x128xbf16, #tpu.memory_space<vmem>>) attributes {dimension_semantics = [#tpu.dimension_semantics<parallel>], iteration_bounds = array<i64: 2>, scalar_prefetch = 0 : i64, scratch_operands = 0 : i64, tpu.core_type = #tpu.core_type<tc>, window_params = [{transform_indices = @transform_0, window_bounds = array<i64: 1, 18, 128>}, {pipeline_mode = #tpu.pipeline_mode<synchronous>, transform_indices = @transform_1, window_bounds = array<i64: 384, 128>}, {pipeline_mode = #tpu.pipeline_mode<synchronous>, transform_indices = @transform_2, window_bounds = array<i64: 1, 128>}, {transform_indices = @transform_3, window_bounds = array<i64: 1, 16, 128>}]} {
    %c0 = arith.constant 0 : index
    %c0_0 = arith.constant 0 : index
    %c0_1 = arith.constant 0 : index
    %0 = vector.load %arg1[%c0, %c0_0, %c0_1] : memref<1x18x128xbf16, #tpu.memory_space<vmem>>, vector<1x18x128xbf16>
    %1 = arith.extf %0 : vector<1x18x128xbf16> to vector<1x18x128xf32>
    %2 = vector.extract_strided_slice %1 {offsets = [0, 0, 0], sizes = [1, 16, 128], strides = [1, 1, 1]} : vector<1x18x128xf32> to vector<1x16x128xf32>
    %3 = vector.extract_strided_slice %1 {offsets = [0, 1, 0], sizes = [1, 16, 128], strides = [1, 1, 1]} : vector<1x18x128xf32> to vector<1x16x128xf32>
    %4 = vector.extract_strided_slice %1 {offsets = [0, 2, 0], sizes = [1, 16, 128], strides = [1, 1, 1]} : vector<1x18x128xf32> to vector<1x16x128xf32>
    %5 = tpu.concatenate %2, %3, %4 in 2 : vector<1x16x128xf32>, vector<1x16x128xf32>, vector<1x16x128xf32> -> vector<1x16x384xf32>
    %6 = vector.shape_cast %5 : vector<1x16x384xf32> to vector<16x384xf32>
    %7 = arith.truncf %6 : vector<16x384xf32> to vector<16x384xbf16>
    %c0_2 = arith.constant 0 : index
    %c0_3 = arith.constant 0 : index
    %8 = vector.load %arg2[%c0_2, %c0_3] : memref<384x128xbf16, #tpu.memory_space<vmem>>, vector<384x128xbf16>
    %cst = arith.constant dense<0.000000e+00> : vector<16x128xf32>
    %9 = tpu.matmul %7, %8, %cst {dimension_numbers = #tpu.dot_dimension_numbers<[1], [0], [0], [1], [0, 0, 1, 1], [], []>} : vector<16x384xbf16>, vector<384x128xbf16>, vector<16x128xf32> -> vector<16x128xf32>
    %c0_4 = arith.constant 0 : index
    %c0_5 = arith.constant 0 : index
    %10 = vector.load %arg3[%c0_4, %c0_5] : memref<1x128xf32, #tpu.memory_space<vmem>>, vector<1x128xf32>
    %11 = vector.broadcast %10 : vector<1x128xf32> to vector<16x128xf32>
    %12 = arith.addf %9, %11 : vector<16x128xf32>
    %cst_6 = arith.constant 0.000000e+00 : f32
    %13 = vector.broadcast %cst_6 : f32 to vector<16x128xf32>
    %14 = arith.maximumf %12, %13 : vector<16x128xf32>
    %15 = arith.truncf %14 : vector<16x128xf32> to vector<16x128xbf16>
    %c0_7 = arith.constant 0 : index
    %c0_8 = arith.constant 0 : index
    %c0_9 = arith.constant 0 : index
    %16 = vector.load %arg4[%c0_7, %c0_8, %c0_9] : memref<1x16x128xbf16, #tpu.memory_space<vmem>>, vector<1x16x128xbf16>
    %17 = vector.shape_cast %16 : vector<1x16x128xbf16> to vector<16x128xbf16>
    %18 = vector.shape_cast %15 : vector<16x128xbf16> to vector<1x16x128xbf16>
    tpu.vector_store %arg4[%c0_7, %c0_8, %c0_9], %18 {strides = array<i32>} : memref<1x16x128xbf16, #tpu.memory_space<vmem>>, vector<1x16x128xbf16>,
    return
  }
  func.func @transform_0(%arg0: i32) -> (i32, i32, i32) {
    %c0_i32 = arith.constant 0 : i32
    %c0_i32_0 = arith.constant 0 : i32
    %c0_i32_1 = arith.constant 0 : i32
    return %arg0, %c0_i32, %c0_i32_0 : i32, i32, i32
  }
  func.func @transform_1(%arg0: i32) -> (i32, i32) {
    %c0_i32 = arith.constant 0 : i32
    %c0_i32_0 = arith.constant 0 : i32
    %c0_i32_1 = arith.constant 0 : i32
    return %c0_i32, %c0_i32_0 : i32, i32
  }
  func.func @transform_2(%arg0: i32) -> (i32, i32) {
    %c0_i32 = arith.constant 0 : i32
    %c0_i32_0 = arith.constant 0 : i32
    %c0_i32_1 = arith.constant 0 : i32
    return %c0_i32, %c0_i32_0 : i32, i32
  }
  func.func @transform_3(%arg0: i32) -> (i32, i32, i32) {
    %c0_i32 = arith.constant 0 : i32
    %c0_i32_0 = arith.constant 0 : i32
    %c0_i32_1 = arith.constant 0 : i32
    return %arg0, %c0_i32, %c0_i32_0 : i32, i32, i32
  }
}

</mosaic_0001>

<llo_original>
// kernel: mixed_precision_forward.1
$region0: #{mixed_precision_forward.1}
  #allocation0 [shape = 'u32[]', space=smem, size = 0x4, offset = 0x4, fixed_abs, tag = 'smem constant byte address 0x4 - core index']
  #allocation1 [shape = 'u32[144,128]{1,0:T(1,128)}', space=vmem, size = 0x12000, scoped, tag = 'internal scratch']
  %s0 = inlined_call_operand.vmem [shape: bf16[2,18,128], index: 0, kind: input, shape index: {}]
  %s1 = inlined_call_operand.vmem [shape: bf16[384,128], index: 1, kind: input, shape index: {}]
  %s2 = inlined_call_operand.vmem [shape: f32[1,128], index: 2, kind: input, shape index: {}]
  %s3 = inlined_call_operand.vmem [shape: bf16[2,16,128], index: 3, kind: output, shape index: {}]
  %s4 = sld [smem:[#allocation0]]
  $region45: #{mixed_precision_forward.1} parent=0
    _
  %s6 = ssub.s32 1, %s4
  %s7 = scalar_select 0, %s6, %s4
  loop: start=0, step=1, limit=4
  $region2: #{mixed_precision_forward.1} parent=0 // loop_pre_header
    _
  $region3: #{mixed_precision_forward.1} parent=0 // loop_header
    %s9 = sphi 0, %s13
    %p10 = scmp.ge.s32.totalorder %s9, 4
    %s19 = sphi 0, %s21
    %s22 = sphi 0, %s19
    %s23 = sphi 0, %s22
    %s39 = sphi 0, %s23
    %s43 = sphi 0, %s43
    %s45 = sphi 0, %s43
    %s46 = sphi 0, %s45
    %s60 = sphi 0, %s46
    %s64 = sphi 0, %s64
    %s66 = sphi 0, %s64
    %s67 = sphi 0, %s66
    %s81 = sphi 0, %s67
    %s87 = sphi 0, %s89
    %s90 = sphi 0, %s87
    %s91 = sphi 0, %s90
    %s107 = sphi 0, %s91
  $region4: #{mixed_precision_forward.1} parent=0 // loop_header_branch
    %12 = sbr.rel (%p10) target = $region8
  $region5: #{mixed_precision_forward.1} parent=0 // loop_body
    %s14 = ssub.s32 %s9, 1
    %s15 = ssub.s32 %s9, 2
    %s16 = sadd.s32 %s9, 1
    %s17 = ssub.s32 %s9, %s16
    %p18 = scmp.eq.s32.totalorder %s17, 0
    %s20 = sadd.s32 %s19, 1
    %s21 = scalar_select %p18, %s19, %s20
    %p24 = pneg %p18
    %p25 = scmp.eq.s32.totalorder %s9, 1
    %p26 = por %p24, %p25
    %p27 = scmp.ne.s32.totalorder %s19, %s22
    %p28 = scmp.eq.s32.totalorder %s9, 0
    %p29 = por %p27, %p28
    %p30 = scmp.ne.s32.totalorder %s19, %s22
    %p31 = scmp.eq.s32.totalorder %s14, 1
    %p32 = por %p30, %p31
    %p33 = scmp.ne.s32.totalorder %s22, %s23
    %p34 = scmp.eq.s32.totalorder %s14, 0
    %p35 = por %p33, %p34
    %p36 = scmp.ne.s32.totalorder %s22, %s23
    %p37 = scmp.eq.s32.totalorder %s15, 1
    %p38 = por %p36, %p37
    %p40 = scmp.ne.s32.totalorder %s23, %s39
    %p41 = scmp.eq.s32.totalorder %s15, 0
    %p42 = por %p40, %p41
    %s44 = sadd.s32 %s43, 1
    %p47 = scmp.eq.s32.totalorder %s9, 1
    %p48 = scmp.ne.s32.totalorder %s43, %s45
    %p49 = scmp.eq.s32.totalorder %s9, 0
    %p50 = por %p48, %p49
    %p51 = scmp.ne.s32.totalorder %s43, %s45
    %p52 = scmp.eq.s32.totalorder %s14, 1
    %p53 = por %p51, %p52
    %p54 = scmp.ne.s32.totalorder %s45, %s46
    %p55 = scmp.eq.s32.totalorder %s14, 0
    %p56 = por %p54, %p55
    %p57 = scmp.ne.s32.totalorder %s45, %s46
    %p58 = scmp.eq.s32.totalorder %s15, 1
    %p59 = por %p57, %p58
    %p61 = scmp.ne.s32.totalorder %s46, %s60
    %p62 = scmp.eq.s32.totalorder %s15, 0
    %p63 = por %p61, %p62
    %s65 = sadd.s32 %s64, 1
    %p68 = scmp.eq.s32.totalorder %s9, 1
    %p69 = scmp.ne.s32.totalorder %s64, %s66
    %p70 = scmp.eq.s32.totalorder %s9, 0
    %p71 = por %p69, %p70
    %p72 = scmp.ne.s32.totalorder %s64, %s66
    %p73 = scmp.eq.s32.totalorder %s14, 1
    %p74 = por %p72, %p73
    %p75 = scmp.ne.s32.totalorder %s66, %s67
    %p76 = scmp.eq.s32.totalorder %s14, 0
    %p77 = por %p75, %p76
    %p78 = scmp.ne.s32.totalorder %s66, %s67
    %p79 = scmp.eq.s32.totalorder %s15, 1
    %p80 = por %p78, %p79
    %p82 = scmp.ne.s32.totalorder %s67, %s81
    %p83 = scmp.eq.s32.totalorder %s15, 0
    %p84 = por %p82, %p83
    %s85 = ssub.s32 %s9, %s16
    %p86 = scmp.eq.s32.totalorder %s85, 0
    %s88 = sadd.s32 %s87, 1
    %s89 = scalar_select %p86, %s87, %s88
    %p92 = pneg %p86
    %p93 = scmp.eq.s32.totalorder %s9, 1
    %p94 = por %p92, %p93
    %p95 = scmp.ne.s32.totalorder %s87, %s90
    %p96 = scmp.eq.s32.totalorder %s9, 0
    %p97 = por %p95, %p96
    %p98 = scmp.ne.s32.totalorder %s87, %s90
    %p99 = scmp.eq.s32.totalorder %s14, 1
    %p100 = por %p98, %p99
    %p101 = scmp.ne.s32.totalorder %s90, %s91
    %p102 = scmp.eq.s32.totalorder %s14, 0
    %p103 = por %p101, %p102
    %p104 = scmp.ne.s32.totalorder %s90, %s91
    %p105 = scmp.eq.s32.totalorder %s15, 1
    %p106 = por %p104, %p105
    %p108 = scmp.ne.s32.totalorder %s91, %s107
    %p109 = scmp.eq.s32.totalorder %s15, 0
    %p110 = por %p108, %p109
    %p111 = scmp.le.s32.totalorder 1, %s9
    %p112 = scmp.lt.s32.totalorder %s9, 3
    %p113 = pnand %p111, %p112
    %p114 = pneg %p113
    // Predicated region
    $region9: #{mixed_precision_forward.1} parent=5 // pred_check
      _
    $region10: #{mixed_precision_forward.1} parent=5 // pred_check_branch
      %116 = sbr.rel (%p113) target = $region12
    $region11: #{mixed_precision_forward.1} parent=5 // pred_region
      %s117 = ssub.s32 %s9, 1
      // Predicated region
      $region13: #{mixed_precision_forward.1} parent=11 // pred_check
        %p118 = pneg %p56
      $region14: #{mixed_precision_forward.1} parent=11 // pred_check_branch
        %120 = sbr.rel (%p118) target = $region16
      $region15: #{mixed_precision_forward.1} parent=11 // pred_region
        _
      $region16: #{mixed_precision_forward.1} parent=11 // pred_fallthru
        _
      // Predicated region
      $region17: #{mixed_precision_forward.1} parent=11 // pred_check
        %p121 = pneg %p77
      $region18: #{mixed_precision_forward.1} parent=11 // pred_check_branch
        %123 = sbr.rel (%p121) target = $region20
      $region19: #{mixed_precision_forward.1} parent=11 // pred_region
        _
      $region20: #{mixed_precision_forward.1} parent=11 // pred_fallthru
        _
    $region12: #{mixed_precision_forward.1} parent=5 // pred_fallthru
      _
    %p124 = scmp.lt.s32.totalorder %s9, 2
    // Predicated region
    $region21: #{mixed_precision_forward.1} parent=5 // pred_check
      %p125 = pneg %p124
    $region22: #{mixed_precision_forward.1} parent=5 // pred_check_branch
      %127 = sbr.rel (%p125) target = $region24
    $region23: #{mixed_precision_forward.1} parent=5 // pred_region
      // Predicated region
      $region25: #{mixed_precision_forward.1} parent=23 // pred_check
        %p128 = pneg %p29
      $region26: #{mixed_precision_forward.1} parent=23 // pred_check_branch
        %130 = sbr.rel (%p128) target = $region28
      $region27: #{mixed_precision_forward.1} parent=23 // pred_region
        %p131 = scmp.lt.s32.totalorder %s9, 1
        %s132 = scalar_select %p131, %s9, 1
        %s133 = smul.addr %s132, 3
        %s134 = smul.addr %s133, 4
        %s135 = scalar_lea.vmem %s0, %s134
      $region28: #{mixed_precision_forward.1} parent=23 // pred_fallthru
        _
    $region24: #{mixed_precision_forward.1} parent=5 // pred_fallthru
      _
    %p136 = scmp.le.s32.totalorder 1, %s9
    %p137 = scmp.lt.s32.totalorder %s9, 3
    %p138 = pnand %p136, %p137
    %p139 = pneg %p138
    // Predicated region
    $region29: #{mixed_precision_forward.1} parent=5 // pred_check
      _
    $region30: #{mixed_precision_forward.1} parent=5 // pred_check_branch
      %141 = sbr.rel (%p138) target = $region32
    $region31: #{mixed_precision_forward.1} parent=5 // pred_region
      %s142 = ssub.s32 %s9, 1
      %p143 = scmp.lt.s32.totalorder %s14, 1
      %s144 = scalar_select %p143, %s14, 1
      %s145 = smul.addr %s144, 3
      %s146 = smul.addr %s145, 4
      %s147 = scalar_lea.vmem %s0, %s146
      %p148 = pneg %p35
      %p149 = pneg %p32
      %p150 = pneg %p56
      %p151 = pneg %p53
      %p152 = pneg %p77
      %p153 = pneg %p74
      %p154 = pneg %p103
      %p155 = pneg %p100
      %p156 = scmp.lt.s32.totalorder %s14, 1
      %s157 = scalar_select %p156, %s14, 1
      %s158 = smul.addr %s157, 2
      %s159 = smul.addr %s158, 4
      %s160 = scalar_lea.vmem %s3, %s159
      %p161 = scmp.lt.s32.totalorder %s14, 1
      %s162 = scalar_select %p161, %s14, 1
      %s163 = smul.addr %s162, 3
      %s164 = smul.addr %s163, 4
      %s165 = scalar_lea.vmem %s0, %s164
      %p166 = scmp.lt.s32.totalorder %s14, 1
      %s167 = scalar_select %p166, %s14, 1
      %s168 = smul.addr %s167, 2
      %s169 = smul.addr %s168, 4
      %s170 = scalar_lea.vmem %s3, %s169
      %v172 = vld [vmem:[%s165] sm:$0xf]
      %v173 = vld [vmem:[%s165 + $0x4] sm:$0xf]
      %v174 = vld [vmem:[%s165 + $0x8] sm:$0x1]
      %v175 = vunpack.c.l.bf16 %v172
      %v176 = vunpack.c.l.bf16 %v173
      %v177 = vunpack.c.l.bf16 %v174
      %vm181 = vcmask 1046528
      %v182 = vrot.slane %v175, 1
      %v183 = vrot.slane %v176, 1
      %v184 = vsel %vm181, %v182, %v183
      %v185 = vrot.slane %v177, 1
      %v186 = vsel %vm181, %v183, %v185
      %vm189 = vcmask 1045504
      %v190 = vrot.slane %v175, 2
      %v191 = vrot.slane %v176, 2
      %v192 = vsel %vm189, %v190, %v191
      %v193 = vrot.slane %v177, 2
      %v194 = vsel %vm189, %v191, %v193
      %v197 = vpack.c.bf16 %v176, %v175
      %v198 = vpack.c.bf16 %v186, %v184
      %v199 = vpack.c.bf16 %v194, %v192
      %v200 = vld [vmem:[%s1] sm:$0xf]
      %v201 = vld [vmem:[%s1 + $0x4] sm:$0xf]
      %v202 = vld [vmem:[%s1 + $0x8] sm:$0xf]
      %v203 = vld [vmem:[%s1 + $0xc] sm:$0xf]
      %v204 = vld [vmem:[%s1 + $0x10] sm:$0xf]
      %v205 = vld [vmem:[%s1 + $0x14] sm:$0xf]
      %v206 = vld [vmem:[%s1 + $0x18] sm:$0xf]
      %v207 = vld [vmem:[%s1 + $0x1c] sm:$0xf]
      %v208 = vld [vmem:[%s1 + $0x20] sm:$0xf]
      %v209 = vld [vmem:[%s1 + $0x24] sm:$0xf]
      %v210 = vld [vmem:[%s1 + $0x28] sm:$0xf]
      %v211 = vld [vmem:[%s1 + $0x2c] sm:$0xf]
      %v212 = vld [vmem:[%s1 + $0x30] sm:$0xf]
      %v213 = vld [vmem:[%s1 + $0x34] sm:$0xf]
      %v214 = vld [vmem:[%s1 + $0x38] sm:$0xf]
      %v215 = vld [vmem:[%s1 + $0x3c] sm:$0xf]
      %v216 = vld [vmem:[%s1 + $0x40] sm:$0xf]
      %v217 = vld [vmem:[%s1 + $0x44] sm:$0xf]
      %v218 = vld [vmem:[%s1 + $0x48] sm:$0xf]
      %v219 = vld [vmem:[%s1 + $0x4c] sm:$0xf]
      %v220 = vld [vmem:[%s1 + $0x50] sm:$0xf]
      %v221 = vld [vmem:[%s1 + $0x54] sm:$0xf]
      %v222 = vld [vmem:[%s1 + $0x58] sm:$0xf]
      %v223 = vld [vmem:[%s1 + $0x5c] sm:$0xf]
      %v224 = vld [vmem:[%s1 + $0x60] sm:$0xf]
      %v225 = vld [vmem:[%s1 + $0x64] sm:$0xf]
      %v226 = vld [vmem:[%s1 + $0x68] sm:$0xf]
      %v227 = vld [vmem:[%s1 + $0x6c] sm:$0xf]
      %v228 = vld [vmem:[%s1 + $0x70] sm:$0xf]
      %v229 = vld [vmem:[%s1 + $0x74] sm:$0xf]
      %v230 = vld [vmem:[%s1 + $0x78] sm:$0xf]
      %v231 = vld [vmem:[%s1 + $0x7c] sm:$0xf]
      %v232 = vld [vmem:[%s1 + $0x80] sm:$0xf]
      %v233 = vld [vmem:[%s1 + $0x84] sm:$0xf]
      %v234 = vld [vmem:[%s1 + $0x88] sm:$0xf]
      %v235 = vld [vmem:[%s1 + $0x8c] sm:$0xf]
      %v236 = vld [vmem:[%s1 + $0x90] sm:$0xf]
      %v237 = vld [vmem:[%s1 + $0x94] sm:$0xf]
      %v238 = vld [vmem:[%s1 + $0x98] sm:$0xf]
      %v239 = vld [vmem:[%s1 + $0x9c] sm:$0xf]
      %v240 = vld [vmem:[%s1 + $0xa0] sm:$0xf]
      %v241 = vld [vmem:[%s1 + $0xa4] sm:$0xf]
      %v242 = vld [vmem:[%s1 + $0xa8] sm:$0xf]
      %v243 = vld [vmem:[%s1 + $0xac] sm:$0xf]
      %v244 = vld [vmem:[%s1 + $0xb0] sm:$0xf]
      %v245 = vld [vmem:[%s1 + $0xb4] sm:$0xf]
      %v246 = vld [vmem:[%s1 + $0xb8] sm:$0xf]
      %v247 = vld [vmem:[%s1 + $0xbc] sm:$0xf]
      %v248 = vld [vmem:[%s2] sm:$0x1]
      %v250 = vlaneseq
      %v251 = vshrl.u32 %v250, 7
      %v252 = vsub.s32 0, %v251
      %v253 = vrot.slane %v248, %v252
      %v303 = vunpack.c.l.b16 %v200
      %v304 = vunpack.c.l.b16 %v201
      %v305 = vunpack.c.l.b16 %v202
      %v306 = vunpack.c.l.b16 %v203
      %v307 = vunpack.c.l.b16 %v204
      %v308 = vunpack.c.l.b16 %v205
      %v309 = vunpack.c.l.b16 %v206
      %v310 = vunpack.c.l.b16 %v207
      %v311 = vunpack.c.l.b16 %v208
      %v312 = vunpack.c.l.b16 %v209
      %v313 = vunpack.c.l.b16 %v210
      %v314 = vunpack.c.l.b16 %v211
      %v315 = vunpack.c.l.b16 %v212
      %v316 = vunpack.c.l.b16 %v213
      %v317 = vunpack.c.l.b16 %v214
      %v318 = vunpack.c.l.b16 %v215
      %v319 = vunpack.c.l.b16 %v216
      %v320 = vunpack.c.l.b16 %v217
      %v321 = vunpack.c.l.b16 %v218
      %v322 = vunpack.c.l.b16 %v219
      %v323 = vunpack.c.l.b16 %v220
      %v324 = vunpack.c.l.b16 %v221
      %v325 = vunpack.c.l.b16 %v222
      %v326 = vunpack.c.l.b16 %v223
      %v327 = vunpack.c.l.b16 %v224
      %v328 = vunpack.c.l.b16 %v225
      %v329 = vunpack.c.l.b16 %v226
      %v330 = vunpack.c.l.b16 %v227
      %v331 = vunpack.c.l.b16 %v228
      %v332 = vunpack.c.l.b16 %v229
      %v333 = vunpack.c.l.b16 %v230
      %v334 = vunpack.c.l.b16 %v231
      %v335 = vunpack.c.l.b16 %v232
      %v336 = vunpack.c.l.b16 %v233
      %v337 = vunpack.c.l.b16 %v234
      %v338 = vunpack.c.l.b16 %v235
      %v339 = vunpack.c.l.b16 %v236
      %v340 = vunpack.c.l.b16 %v237
      %v341 = vunpack.c.l.b16 %v238
      %v342 = vunpack.c.l.b16 %v239
      %v343 = vunpack.c.l.b16 %v240
      %v344 = vunpack.c.l.b16 %v241
      %v345 = vunpack.c.l.b16 %v242
      %v346 = vunpack.c.l.b16 %v243
      %v347 = vunpack.c.l.b16 %v244
      %v348 = vunpack.c.l.b16 %v245
      %v349 = vunpack.c.l.b16 %v246
      %v350 = vunpack.c.l.b16 %v247
      %v351 = vpack.c.b16 %v304, %v303
      %v352 = vpack.c.b16 %v306, %v305
      %v353 = vpack.c.b16 %v308, %v307
      %v354 = vpack.c.b16 %v310, %v309
      %v355 = vpack.c.b16 %v312, %v311
      %v356 = vpack.c.b16 %v314, %v313
      %v357 = vpack.c.b16 %v316, %v315
      %v358 = vpack.c.b16 %v318, %v317
      %v359 = vpack.c.b16 %v320, %v319
      %v360 = vpack.c.b16 %v322, %v321
      %v361 = vpack.c.b16 %v324, %v323
      %v362 = vpack.c.b16 %v326, %v325
      %v363 = vpack.c.b16 %v328, %v327
      %v364 = vpack.c.b16 %v330, %v329
      %v365 = vpack.c.b16 %v332, %v331
      %v366 = vpack.c.b16 %v334, %v333
      %v367 = vpack.c.b16 %v336, %v335
      %v368 = vpack.c.b16 %v338, %v337
      %v369 = vpack.c.b16 %v340, %v339
      %v370 = vpack.c.b16 %v342, %v341
      %v371 = vpack.c.b16 %v344, %v343
      %v372 = vpack.c.b16 %v346, %v345
      %v373 = vpack.c.b16 %v348, %v347
      %v374 = vpack.c.b16 %v350, %v349
      %399 = vmatprep.subr.bf16.mxu0 0
      %400 = vmatpush1.bf16.msra.mxu0 %v351
      %401 = vmatprep.subr.bf16.mxu0 0
      %402 = vmatpush1.bf16.msra.mxu0 %v352
      %403 = vmatprep.subr.bf16.mxu0 0
      %404 = vmatpush1.bf16.msra.mxu0 %v353
      %405 = vmatprep.subr.bf16.mxu0 0
      %406 = vmatpush1.bf16.msra.mxu0 %v354
      %407 = vmatprep.subr.bf16.mxu0 0
      %408 = vmatpush1.bf16.msra.mxu0 %v355
      %409 = vmatprep.subr.bf16.mxu0 0
      %410 = vmatpush1.bf16.msra.mxu0 %v356
      %411 = vmatprep.subr.bf16.mxu0 0
      %412 = vmatpush1.bf16.msra.mxu0 %v357
      %413 = vmatprep.subr.bf16.mxu0 0
      %414 = vmatpush1.bf16.msra.mxu0 %v358
      %415 = vmatprep.subr.bf16.mxu0 0
      %416 = vmatpush1.bf16.msra.mxu0 %v359
      %417 = vmatprep.subr.bf16.mxu0 0
      %418 = vmatpush1.bf16.msra.mxu0 %v360
      %419 = vmatprep.subr.bf16.mxu0 0
      %420 = vmatpush1.bf16.msra.mxu0 %v361
      %421 = vmatprep.subr.bf16.mxu0 0
      %422 = vmatpush1.bf16.msra.mxu0 %v362
      %423 = vmatprep.subr.bf16.mxu0 0
      %424 = vmatpush1.bf16.msra.mxu0 %v363
      %425 = vmatprep.subr.bf16.mxu0 0
      %426 = vmatpush1.bf16.msra.mxu0 %v364
      %427 = vmatprep.subr.bf16.mxu0 0
      %428 = vmatpush1.bf16.msra.mxu0 %v365
      %429 = vmatprep.subr.bf16.mxu0 0
      %430 = vmatpush1.bf16.msra.mxu0 %v366
      %431 = vmatprep.mubr.bf16.mxu0 %v198
      %432 = vmatmul.mubr.bf16.gmra.mrb[0].mxu0 %v197
      %v433 = vpop.f32.mrb[0].mxu0
      %v434 = vadd.f32 %v253, %v433
      %v435 = vpop.f32.mrb[0].mxu0
      %v436 = vpop.f32.mrb[0].mxu0
      %v437 = vadd.f32 %v253, %v436
      %v438 = vpop.f32.mrb[0].mxu0
      %439 = vdwg.mxu0
      %440 = vmatprep.subr.bf16.mxu0 0
      %441 = vmatpush1.bf16.msra.mxu0 %v367
      %442 = vmatprep.subr.bf16.mxu0 0
      %443 = vmatpush1.bf16.msra.mxu0 %v368
      %444 = vmatprep.subr.bf16.mxu0 0
      %445 = vmatpush1.bf16.msra.mxu0 %v369
      %446 = vmatprep.subr.bf16.mxu0 0
      %447 = vmatpush1.bf16.msra.mxu0 %v370
      %448 = vmatprep.subr.bf16.mxu0 0
      %449 = vmatpush1.bf16.msra.mxu0 %v371
      %450 = vmatprep.subr.bf16.mxu0 0
      %451 = vmatpush1.bf16.msra.mxu0 %v372
      %452 = vmatprep.subr.bf16.mxu0 0
      %453 = vmatpush1.bf16.msra.mxu0 %v373
      %454 = vmatprep.subr.bf16.mxu0 0
      %455 = vmatpush1.bf16.msra.mxu0 %v374
      %456 = vmatprep.subr.bf16.mxu0 0
      %457 = vmatpush1.bf16.msra.mxu0 0
      %458 = vmatprep.subr.bf16.mxu0 0
      %459 = vmatpush1.bf16.msra.mxu0 0
      %460 = vmatprep.subr.bf16.mxu0 0
      %461 = vmatpush1.bf16.msra.mxu0 0
      %462 = vmatprep.subr.bf16.mxu0 0
      %463 = vmatpush1.bf16.msra.mxu0 0
      %464 = vmatprep.subr.bf16.mxu0 0
      %465 = vmatpush1.bf16.msra.mxu0 0
      %466 = vmatprep.subr.bf16.mxu0 0
      %467 = vmatpush1.bf16.msra.mxu0 0
      %468 = vmatprep.subr.bf16.mxu0 0
      %469 = vmatpush1.bf16.msra.mxu0 0
      %470 = vmatprep.subr.bf16.mxu0 0
      %471 = vmatpush1.bf16.msra.mxu0 0
      %472 = vmatprep.mubr.bf16.mxu0 0
      %473 = vmatmul.mubr.bf16.gmra.mrb[0].mxu0 %v199
      %v474 = vpop.f32.mrb[0].mxu0
      %v475 = vadd.f32 %v434, %v474
      %v476 = vpop.f32.mrb[0].mxu0
      %v477 = vpop.f32.mrb[0].mxu0
      %v478 = vadd.f32 %v437, %v477
      %v479 = vpop.f32.mrb[0].mxu0
      %480 = vdwg.mxu0
      %v481 = vmax.f32 %v475, 0.0
      %v482 = vmax.f32 %v478, 0.0
      %v483 = vpack.c.bf16 %v482, %v481
      %v485 = vunpack.c.l.b16 %v483
      %v486 = vunpack.c.h.b16 %v483
      %v487 = vpack.c.b16 %v485, %v485
      %v488 = vpack.c.b16 %v486, %v486
      %491 = vst [vmem:[%s170] sm:$0xf] %v487
      %492 = vst [vmem:[%s170 + $0x4] sm:$0xf] %v488
      %p493 = scmp.lt.s32.totalorder %s14, 1
      %s494 = scalar_select %p493, %s14, 1
      %s495 = smul.addr %s494, 2
      %s496 = smul.addr %s495, 4
      %s497 = scalar_lea.vmem %s3, %s496
      // Predicated region
      $region33: #{mixed_precision_forward.1} parent=31 // pred_check
        %p498 = pneg %p100
      $region34: #{mixed_precision_forward.1} parent=31 // pred_check_branch
        %500 = sbr.rel (%p498) target = $region36
      $region35: #{mixed_precision_forward.1} parent=31 // pred_region
        _
      $region36: #{mixed_precision_forward.1} parent=31 // pred_fallthru
        _
    $region32: #{mixed_precision_forward.1} parent=5 // pred_fallthru
      _
    %p501 = scmp.le.s32.totalorder 2, %s9
    // Predicated region
    $region37: #{mixed_precision_forward.1} parent=5 // pred_check
      %p502 = pneg %p501
    $region38: #{mixed_precision_forward.1} parent=5 // pred_check_branch
      %504 = sbr.rel (%p502) target = $region40
    $region39: #{mixed_precision_forward.1} parent=5 // pred_region
      %s505 = ssub.s32 %s9, 2
      // Predicated region
      $region41: #{mixed_precision_forward.1} parent=39 // pred_check
        %p506 = pneg %p106
      $region42: #{mixed_precision_forward.1} parent=39 // pred_check_branch
        %508 = sbr.rel (%p506) target = $region44
      $region43: #{mixed_precision_forward.1} parent=39 // pred_region
        %p509 = scmp.lt.s32.totalorder %s15, 1
        %s510 = scalar_select %p509, %s15, 1
        %s511 = smul.addr %s510, 2
        %s512 = smul.addr %s511, 4
        %s513 = scalar_lea.vmem %s3, %s512
      $region44: #{mixed_precision_forward.1} parent=39 // pred_fallthru
        _
    $region40: #{mixed_precision_forward.1} parent=5 // pred_fallthru
      _
  $region6: #{mixed_precision_forward.1} parent=0 // loop_footer
    %s13 = sadd.s32 1, %s9
  $region7: #{mixed_precision_forward.1} parent=0 // loop_footer_branch
    %8 = sbr.rel target = $region3
  $region8: #{mixed_precision_forward.1} parent=0 // loop_exit
    _

</llo_original>
